<compile_context>
chip_gen: v7x
topology: tpu7x:2x2x1
jax: 0.10.0
libtpu: 0.0.40
codegen_flags: <defaults>
</compile_context>

<pallas_src>
import numpy as np
import jax
import jax.numpy as jnp
from jax.experimental import pallas as pl
from jax.experimental.pallas import tpu as pltpu

# ----------------------------- configuration -------------------------------
BATCH = 8                 # e.g. 2 envs * 4 agents
INPUT_SHAPE = 24          # obs dim
N_AGENTS = 4
RNN_HIDDEN_DIM = 32
HIDDEN_COM_DIM = RNN_HIDDEN_DIM // N_AGENTS     # 8
COM_ALL = HIDDEN_COM_DIM * N_AGENTS             # 32
N_ACTIONS = 6
SEQ_LEN = 8

FE_DIM = RNN_HIDDEN_DIM + HIDDEN_COM_DIM        # 40, fused fc1|encode width

# ----------------- weight-slab row offsets (all sublane-aligned) ------------
R_WFE = 0                                        # (24, 40)  [fc1_w.T | enc_w.T]
R_WDEC = R_WFE + INPUT_SHAPE                     # (40, 32)  decode, comm fold
R_WGRU = R_WDEC + FE_DIM                         # (64, 128) fused GRU weight
R_WHH = R_WGRU + 2 * RNN_HIDDEN_DIM              # (32, 96)  W_hh (r|z|n)
R_WFC2 = R_WHH + RNN_HIDDEN_DIM                  # (32, 6)   fc2
R_BIAS = R_WFC2 + RNN_HIDDEN_DIM                 # (8, 128)  packed bias rows
SLAB_ROWS = R_BIAS + 8                           # 200 rows total


# ------------------------------- kernels ------------------------------------
def rnn_agent_step_kernel(inp_ref, h_ref, w_ref, q_ref, h_out_ref):
    """Single GRUCell step.  4 matmuls; GRU gates fused into one (B,64)@(64,128)."""
    f32 = jnp.float32
    H, A = RNN_HIDDEN_DIM, N_ACTIONS

    wfe = w_ref[R_WFE:R_WFE + INPUT_SHAPE, :FE_DIM]
    wdec = w_ref[R_WDEC:R_WDEC + FE_DIM, :H]
    wgru = w_ref[R_WGRU:R_WGRU + 2 * H, :]          # (64, 128)
    wfc2 = w_ref[R_WFC2:R_WFC2 + H, :A]
    b_fe = w_ref[R_BIAS + 0:R_BIAS + 1, :FE_DIM]
    b_dec = w_ref[R_BIAS + 1:R_BIAS + 2, :H]
    b_gru = w_ref[R_BIAS + 2:R_BIAS + 3, :]         # (1, 128)
    b_q = w_ref[R_BIAS + 3:R_BIAS + 4, :A]

    x = inp_ref[...]
    h = h_ref[...]

    # fused fc1 + encode:  xe = [relu(fc1(x)) | relu(encode(x))]
    xe = jnp.maximum(jnp.dot(x, wfe, preferred_element_type=f32) + b_fe, 0.0)
    # decode; the n_agents lane-replication of x_com is folded into wdec rows.
    xd = jnp.maximum(jnp.dot(xe, wdec, preferred_element_type=f32) + b_dec, 0.0)

    # fused GRU gates: cols 0:64 = (gi+gh)_rz (+ summed biases),
    #                  64:96 = gi_n (+b_in), 96:128 = gh_n (+b_hn)
    g = jnp.dot(jnp.concatenate([xd, h], axis=-1), wgru,
                preferred_element_type=f32) + b_gru
    rz = jax.nn.sigmoid(g[:, :2 * H])
    r = rz[:, :H]
    z = rz[:, H:2 * H]
    n = jnp.tanh(g[:, 2 * H:3 * H] + r * g[:, 3 * H:])
    h_new = (1.0 - z) * n + z * h

    q = jnp.dot(h_new, wfc2, preferred_element_type=f32) + b_q
    q_ref[...] = q.astype(q_ref.dtype)
    h_out_ref[...] = h_new.astype(h_out_ref.dtype)


def rnn_agent_seq_kernel(inp_ref, h0_ref, w_ref, q_ref, h_out_ref):
    """Whole sequence in ONE launch.

    Non-recurrent layers (fc1|encode, decode, xd @ W_ih, fc2 head) are batched
    over all T timesteps; only the GRU hidden update runs serially per step.
    """
    f32 = jnp.float32
    H, A = RNN_HIDDEN_DIM, N_ACTIONS
    TB = inp_ref.shape[0]
    B = h0_ref.shape[0]
    T = TB // B

    wfe = w_ref[R_WFE:R_WFE + INPUT_SHAPE, :FE_DIM]
    wdec = w_ref[R_WDEC:R_WDEC + FE_DIM, :H]
    wih3 = w_ref[R_WGRU:R_WGRU + H, :3 * H]          # upper half of W_gru == W_ih.T
    whh3 = w_ref[R_WHH:R_WHH + H, :3 * H]
    wfc2 = w_ref[R_WFC2:R_WFC2 + H, :A]
    b_fe = w_ref[R_BIAS + 0:R_BIAS + 1, :FE_DIM]
    b_dec = w_ref[R_BIAS + 1:R_BIAS + 2, :H]
    b_gi = w_ref[R_BIAS + 2:R_BIAS + 3, :3 * H]      # b_ir+b_hr | b_iz+b_hz | b_in
    b_hn = w_ref[R_BIAS + 2:R_BIAS + 3, 3 * H:]      # b_hn
    b_q = w_ref[R_BIAS + 3:R_BIAS + 4, :A]

    # ---- batched (over all T) non-recurrent layers: M = T*B rows ----
    x = inp_ref[...]                                                   # (TB, D)
    xe = jnp.maximum(jnp.dot(x, wfe, preferred_element_type=f32) + b_fe, 0.0)
    xd = jnp.maximum(jnp.dot(xe, wdec, preferred_element_type=f32) + b_dec, 0.0)
    gi = jnp.dot(xd, wih3, preferred_element_type=f32) + b_gi          # (TB, 96)

    # ---- serial GRU recurrence: one tiny matmul + gates per step ----
    # T is small & static -> trace-time unroll (gives the scheduler full view).
    h = h0_ref[...]
    hs = []
    for t in range(T):
        gi_t = gi[t * B:(t + 1) * B, :]
        gh = jnp.dot(h, whh3, preferred_element_type=f32)
        rz = jax.nn.sigmoid(gi_t[:, :2 * H] + gh[:, :2 * H])
        r = rz[:, :H]
        z = rz[:, H:2 * H]
        n = jnp.tanh(gi_t[:, 2 * H:] + r * (gh[:, 2 * H:] + b_hn))
        h = (1.0 - z) * n + z * h
        hs.append(h)

    # ---- batched output head + single lane-resident stores ----
    h_all = jnp.concatenate(hs, axis=0)                                # (TB, H)
    q_all = jnp.dot(h_all, wfc2, preferred_element_type=f32) + b_q     # (TB, A)
    q_ref[...] = q_all.astype(q_ref.dtype)
    h_out_ref[...] = h.astype(h_out_ref.dtype)


# --------------------------- host-side packing -------------------------------
def pack_params(p):
    """One-time packing of ALL weights + biases into a single (200, 128) slab."""
    H, C, A = RNN_HIDDEN_DIM, HIDDEN_COM_DIM, N_AGENTS

    # fused fc1 | encode weight: [D, 40]
    wfe = jnp.concatenate([p["fc1_w"].T, p["enc_w"].T], axis=1)

    dec_wt = p["dec_w"].T                       # [H + COM_ALL, H]
    dec_wt_x = dec_wt[:H]                       # acts on x
    dec_wt_c = dec_wt[H:]                       # acts on x_com_get
    # fold "repeat each x_com feature n_agents times" into the weight:
    dec_wt_c_eff = dec_wt_c.reshape(C, A, H).sum(axis=1)      # [C, H]
    wdec = jnp.concatenate([dec_wt_x, dec_wt_c_eff], axis=0)  # [40, H]

    wih3 = p["w_ih"].T                          # [H, 3H] columns r|z|n
    whh3 = p["w_hh"].T                          # [H, 3H]
    wfc2 = p["fc2_w"].T                         # [H, n_actions]

    b_ir, b_iz, b_in = jnp.split(p["b_ih"], 3)
    b_hr, b_hz, b_hn = jnp.split(p["b_hh"], 3)

    # fused GRU weight: [[Wih_rz, Wih_n, 0], [Whh_rz, 0, Whh_n]]  -> (64, 128)
    wgru = jnp.zeros((2 * H, 4 * H), jnp.float32)
    wgru = wgru.at[:H, :3 * H].set(wih3)
    wgru = wgru.at[H:, :2 * H].set(whh3[:, :2 * H])
    wgru = wgru.at[H:, 3 * H:].set(whh3[:, 2 * H:])

    bias = jnp.zeros((SLAB_ROWS - R_BIAS, 128), jnp.float32)
    bias = bias.at[0, :FE_DIM].set(jnp.concatenate([p["fc1_b"], p["enc_b"]]))
    bias = bias.at[1, :H].set(p["dec_b"])
    bias = bias.at[2, :2 * H].set(jnp.concatenate([b_ir + b_hr, b_iz + b_hz]))
    bias = bias.at[2, 2 * H:3 * H].set(b_in)
    bias = bias.at[2, 3 * H:].set(b_hn)
    bias = bias.at[3, :N_ACTIONS].set(p["fc2_b"])

    def pad128(m):
        return jnp.pad(m, ((0, 0), (0, 128 - m.shape[1])))

    slab = jnp.concatenate(
        [pad128(wfe), pad128(wdec), wgru, pad128(whh3), pad128(wfc2), bias],
        axis=0).astype(jnp.float32)
    assert slab.shape == (SLAB_ROWS, 128)
    return slab


# ------------------------------ wrappers -------------------------------------
@jax.jit
def rnn_agent_forward(inputs, hidden, slab):
    """Single GRUCell step (matches RNNAgent.forward)."""
    B = inputs.shape[0]
    vmem = pltpu.MemorySpace.VMEM
    q, h = pl.pallas_call(
        rnn_agent_step_kernel,
        out_shape=(
            jax.ShapeDtypeStruct((B, N_ACTIONS), jnp.float32),
            jax.ShapeDtypeStruct((B, RNN_HIDDEN_DIM), jnp.float32),
        ),
        in_specs=[pl.BlockSpec(memory_space=vmem)] * 3,
        out_specs=(pl.BlockSpec(memory_space=vmem),
                   pl.BlockSpec(memory_space=vmem)),
    )(inputs, hidden, slab)
    return q, h


@jax.jit
def rnn_agent_forward_seq(inputs_seq, h0, slab):
    """Apply the cell over a [T, B, D] sequence in a single kernel launch."""
    T, B, D = inputs_seq.shape
    x_flat = inputs_seq.reshape(T * B, D)        # contiguous -> free reshape
    vmem = pltpu.MemorySpace.VMEM
    q_flat, h_last = pl.pallas_call(
        rnn_agent_seq_kernel,
        out_shape=(
            jax.ShapeDtypeStruct((T * B, N_ACTIONS), jnp.float32),
            jax.ShapeDtypeStruct((B, RNN_HIDDEN_DIM), jnp.float32),
        ),
        in_specs=[pl.BlockSpec(memory_space=vmem)] * 3,
        out_specs=(pl.BlockSpec(memory_space=vmem),
                   pl.BlockSpec(memory_space=vmem)),
    )(x_flat, h0, slab)
    return q_flat.reshape(T, B, N_ACTIONS), h_last


# --------------------------- pure-JAX reference ------------------------------
def rnn_agent_reference(inputs, hidden, p):
    x = jax.nn.relu(inputs @ p["fc1_w"].T + p["fc1_b"])
    x_com = jax.nn.relu(inputs @ p["enc_w"].T + p["enc_b"])
    # unsqueeze(-1).expand(...,-1,A).reshape == repeat each feature A times
    x_com_get = jnp.repeat(x_com, N_AGENTS, axis=-1)
    xc = jnp.concatenate([x, x_com_get], axis=-1)
    xd = jax.nn.relu(xc @ p["dec_w"].T + p["dec_b"])

    gi = xd @ p["w_ih"].T + p["b_ih"]
    gh = hidden @ p["w_hh"].T + p["b_hh"]
    i_r, i_z, i_n = jnp.split(gi, 3, axis=-1)
    h_r, h_z, h_n = jnp.split(gh, 3, axis=-1)
    r = jax.nn.sigmoid(i_r + h_r)
    z = jax.nn.sigmoid(i_z + h_z)
    n = jnp.tanh(i_n + r * h_n)
    h = (1.0 - z) * n + z * hidden
    q = h @ p["fc2_w"].T + p["fc2_b"]
    return q, h


# -------------------------- deterministic init -------------------------------
def _uinit(key, shape, fan_in):
    bound = 1.0 / float(np.sqrt(fan_in))
    return jax.random.uniform(key, shape, jnp.float32, minval=-bound, maxval=bound)


def make_params(seed=42):
    H, D, A = RNN_HIDDEN_DIM, INPUT_SHAPE, N_ACTIONS
    dec_in = COM_ALL + H
    ks = jax.random.split(jax.random.PRNGKey(seed), 12)
    return {
        "fc1_w": _uinit(ks[0], (H, D), D),
        "fc1_b": _uinit(ks[1], (H,), D),
        "enc_w": _uinit(ks[2], (HIDDEN_COM_DIM, D), D),
        "enc_b": _uinit(ks[3], (HIDDEN_COM_DIM,), D),
        "dec_w": _uinit(ks[4], (H, dec_in), dec_in),
        "dec_b": _uinit(ks[5], (H,), dec_in),
        "w_ih": _uinit(ks[6], (3 * H, H), H),
        "w_hh": _uinit(ks[7], (3 * H, H), H),
        "b_ih": _uinit(ks[8], (3 * H,), H),
        "b_hh": _uinit(ks[9], (3 * H,), H),
        "fc2_w": _uinit(ks[10], (A, H), H),
        "fc2_b": _uinit(ks[11], (A,), H),
    }


# ---------------------------------- main -------------------------------------
if __name__ == "__main__":
    params = make_params()
    slab = pack_params(params)       # one-time host-side packing

    key = jax.random.PRNGKey(0)
    k_in, k_h, k_seq = jax.random.split(key, 3)
    inputs = jax.random.normal(k_in, (BATCH, INPUT_SHAPE), jnp.float32)
    hidden = 0.1 * jax.random.normal(k_h, (BATCH, RNN_HIDDEN_DIM), jnp.float32)

    # ---- single-step kernel (exact module semantics) ----
    q, h = rnn_agent_forward(inputs, hidden, slab)
    q = jax.block_until_ready(q)
    h = jax.block_until_ready(h)

    q_ref, h_ref = rnn_agent_reference(inputs, hidden, params)
    assert q.shape == (BATCH, N_ACTIONS) and h.shape == (BATCH, RNN_HIDDEN_DIM)
    np.testing.assert_allclose(np.asarray(q), np.asarray(q_ref), atol=2e-4, rtol=2e-4)
    np.testing.assert_allclose(np.asarray(h), np.asarray(h_ref), atol=2e-4, rtol=2e-4)

    # ---- sequence kernel: non-recurrent layers batched over T, one launch ----
    inputs_seq = jax.random.normal(k_seq, (SEQ_LEN, BATCH, INPUT_SHAPE), jnp.float32)
    q_seq, h_last = rnn_agent_forward_seq(inputs_seq, hidden, slab)
    q_seq = jax.block_until_ready(q_seq)
    h_last = jax.block_until_ready(h_last)

    h_r = hidden
    q_ref_list = []
    for t in range(SEQ_LEN):
        q_t, h_r = rnn_agent_reference(inputs_seq[t], h_r, params)
        q_ref_list.append(q_t)
    q_seq_ref = jnp.stack(q_ref_list, axis=0)
    np.testing.assert_allclose(np.asarray(q_seq), np.asarray(q_seq_ref),
                               atol=2e-4, rtol=2e-4)
    np.testing.assert_allclose(np.asarray(h_last), np.asarray(h_r),
                               atol=2e-4, rtol=2e-4)

    print("KERNEL_OK")
</pallas_src>

<mosaic_0001>
module attributes {stable_mosaic.version = 11 : i64} {
  func.func @rnn_agent_step_kernel(%arg0: memref<8x24xf32, #tpu.memory_space<vmem>>, %arg1: memref<8x32xf32, #tpu.memory_space<vmem>>, %arg2: memref<200x128xf32, #tpu.memory_space<vmem>>, %arg3: memref<8x6xf32, #tpu.memory_space<vmem>>, %arg4: memref<8x32xf32, #tpu.memory_space<vmem>>) attributes {dimension_semantics = [], scalar_prefetch = 0 : i64, scratch_operands = 0 : i64, tpu.core_type = #tpu.core_type<tc>} {
    %c0 = arith.constant 0 : index
    %c0_0 = arith.constant 0 : index
    %0 = vector.load %arg2[%c0, %c0_0] : memref<200x128xf32, #tpu.memory_space<vmem>>, vector<24x40xf32>
    %c24 = arith.constant 24 : index
    %c0_1 = arith.constant 0 : index
    %1 = vector.load %arg2[%c24, %c0_1] : memref<200x128xf32, #tpu.memory_space<vmem>>, vector<40x32xf32>
    %c64 = arith.constant 64 : index
    %c0_2 = arith.constant 0 : index
    %2 = vector.load %arg2[%c64, %c0_2] : memref<200x128xf32, #tpu.memory_space<vmem>>, vector<64x128xf32>
    %c160 = arith.constant 160 : index
    %c0_3 = arith.constant 0 : index
    %3 = vector.load %arg2[%c160, %c0_3] : memref<200x128xf32, #tpu.memory_space<vmem>>, vector<32x6xf32>
    %c192 = arith.constant 192 : index
    %c0_4 = arith.constant 0 : index
    %4 = vector.load %arg2[%c192, %c0_4] : memref<200x128xf32, #tpu.memory_space<vmem>>, vector<1x40xf32>
    %c193 = arith.constant 193 : index
    %c0_5 = arith.constant 0 : index
    %5 = vector.load %arg2[%c193, %c0_5] : memref<200x128xf32, #tpu.memory_space<vmem>>, vector<1x32xf32>
    %c194 = arith.constant 194 : index
    %c0_6 = arith.constant 0 : index
    %6 = vector.load %arg2[%c194, %c0_6] : memref<200x128xf32, #tpu.memory_space<vmem>>, vector<1x128xf32>
    %c195 = arith.constant 195 : index
    %c0_7 = arith.constant 0 : index
    %7 = vector.load %arg2[%c195, %c0_7] : memref<200x128xf32, #tpu.memory_space<vmem>>, vector<1x6xf32>
    %c0_8 = arith.constant 0 : index
    %c0_9 = arith.constant 0 : index
    %8 = vector.load %arg0[%c0_8, %c0_9] : memref<8x24xf32, #tpu.memory_space<vmem>>, vector<8x24xf32>
    %c0_10 = arith.constant 0 : index
    %c0_11 = arith.constant 0 : index
    %9 = vector.load %arg1[%c0_10, %c0_11] : memref<8x32xf32, #tpu.memory_space<vmem>>, vector<8x32xf32>
    %cst = arith.constant dense<0.000000e+00> : vector<8x40xf32>
    %10 = tpu.matmul %8, %0, %cst {dimension_numbers = #tpu.dot_dimension_numbers<[1], [0], [0], [1], [0, 0, 1, 1], [], []>} : vector<8x24xf32>, vector<24x40xf32>, vector<8x40xf32> -> vector<8x40xf32>
    %11 = vector.broadcast %4 : vector<1x40xf32> to vector<8x40xf32>
    %12 = arith.addf %10, %11 : vector<8x40xf32>
    %cst_12 = arith.constant 0.000000e+00 : f32
    %13 = vector.broadcast %cst_12 : f32 to vector<8x40xf32>
    %14 = arith.maximumf %12, %13 : vector<8x40xf32>
    %cst_13 = arith.constant dense<0.000000e+00> : vector<8x32xf32>
    %15 = tpu.matmul %14, %1, %cst_13 {dimension_numbers = #tpu.dot_dimension_numbers<[1], [0], [0], [1], [0, 0, 1, 1], [], []>} : vector<8x40xf32>, vector<40x32xf32>, vector<8x32xf32> -> vector<8x32xf32>
    %16 = vector.broadcast %5 : vector<1x32xf32> to vector<8x32xf32>
    %17 = arith.addf %15, %16 : vector<8x32xf32>
    %cst_14 = arith.constant 0.000000e+00 : f32
    %18 = vector.broadcast %cst_14 : f32 to vector<8x32xf32>
    %19 = arith.maximumf %17, %18 : vector<8x32xf32>
    %20 = tpu.concatenate %19, %9 in 1 : vector<8x32xf32>, vector<8x32xf32> -> vector<8x64xf32>
    %cst_15 = arith.constant dense<0.000000e+00> : vector<8x128xf32>
    %21 = tpu.matmul %20, %2, %cst_15 {dimension_numbers = #tpu.dot_dimension_numbers<[1], [0], [0], [1], [0, 0, 1, 1], [], []>} : vector<8x64xf32>, vector<64x128xf32>, vector<8x128xf32> -> vector<8x128xf32>
    %22 = vector.broadcast %6 : vector<1x128xf32> to vector<8x128xf32>
    %23 = arith.addf %21, %22 : vector<8x128xf32>
    %24 = vector.extract_strided_slice %23 {offsets = [0, 0], sizes = [8, 64], strides = [1, 1]} : vector<8x128xf32> to vector<8x64xf32>
    %25 = arith.negf %24 : vector<8x64xf32>
    %26 = math.exp %25 : vector<8x64xf32>
    %cst_16 = arith.constant 1.000000e+00 : f32
    %27 = vector.broadcast %cst_16 : f32 to vector<8x64xf32>
    %28 = arith.addf %27, %26 : vector<8x64xf32>
    %29 = arith.divf %27, %28 : vector<8x64xf32>
    %30 = vector.extract_strided_slice %29 {offsets = [0, 0], sizes = [8, 32], strides = [1, 1]} : vector<8x64xf32> to vector<8x32xf32>
    %31 = vector.extract_strided_slice %29 {offsets = [0, 32], sizes = [8, 32], strides = [1, 1]} : vector<8x64xf32> to vector<8x32xf32>
    %32 = vector.extract_strided_slice %23 {offsets = [0, 64], sizes = [8, 32], strides = [1, 1]} : vector<8x128xf32> to vector<8x32xf32>
    %33 = vector.extract_strided_slice %23 {offsets = [0, 96], sizes = [8, 32], strides = [1, 1]} : vector<8x128xf32> to vector<8x32xf32>
    %34 = arith.mulf %30, %33 : vector<8x32xf32>
    %35 = arith.addf %32, %34 : vector<8x32xf32>
    %36 = math.tanh %35 : vector<8x32xf32>
    %cst_17 = arith.constant 1.000000e+00 : f32
    %37 = vector.broadcast %cst_17 : f32 to vector<8x32xf32>
    %38 = arith.subf %37, %31 : vector<8x32xf32>
    %39 = arith.mulf %38, %36 : vector<8x32xf32>
    %40 = arith.mulf %31, %9 : vector<8x32xf32>
    %41 = arith.addf %39, %40 : vector<8x32xf32>
    %cst_18 = arith.constant dense<0.000000e+00> : vector<8x6xf32>
    %42 = tpu.matmul %41, %3, %cst_18 {dimension_numbers = #tpu.dot_dimension_numbers<[1], [0], [0], [1], [0, 0, 1, 1], [], []>} : vector<8x32xf32>, vector<32x6xf32>, vector<8x6xf32> -> vector<8x6xf32>
    %43 = vector.broadcast %7 : vector<1x6xf32> to vector<8x6xf32>
    %44 = arith.addf %42, %43 : vector<8x6xf32>
    %c0_19 = arith.constant 0 : index
    %c0_20 = arith.constant 0 : index
    %45 = vector.load %arg3[%c0_19, %c0_20] : memref<8x6xf32, #tpu.memory_space<vmem>>, vector<8x6xf32>
    tpu.vector_store %arg3[%c0_19, %c0_20], %44 {strides = array<i32>} : memref<8x6xf32, #tpu.memory_space<vmem>>, vector<8x6xf32>,
    %c0_21 = arith.constant 0 : index
    %c0_22 = arith.constant 0 : index
    %46 = vector.load %arg4[%c0_21, %c0_22] : memref<8x32xf32, #tpu.memory_space<vmem>>, vector<8x32xf32>
    tpu.vector_store %arg4[%c0_21, %c0_22], %41 {strides = array<i32>} : memref<8x32xf32, #tpu.memory_space<vmem>>, vector<8x32xf32>,
    return
  }
}

</mosaic_0001>

<llo_original>
// kernel: rnn_agent_forward.1
$region0: #{rnn_agent_forward.1}
  #allocation0 [shape = 'u32[]', space=smem, size = 0x4, offset = 0x4, fixed_abs, tag = 'smem constant byte address 0x4 - core index']
  #allocation1 [shape = 'u32[144,128]{1,0:T(1,128)}', space=vmem, size = 0x12000, scoped, tag = 'internal scratch']
  %s0 = inlined_call_operand.hbm [shape: f32[8,24], index: 0, kind: input, shape index: {}]
  %s1 = inlined_call_operand.hbm [shape: f32[8,32], index: 1, kind: input, shape index: {}]
  %s2 = inlined_call_operand.hbm [shape: f32[200,128], index: 2, kind: input, shape index: {}]
  %s3 = inlined_call_operand.hbm [shape: f32[8,6], index: 3, kind: output, shape index: {0}]
  %s4 = inlined_call_operand.hbm [shape: f32[8,32], index: 4, kind: output, shape index: {1}]
  %5 = xla_tuple %s3, %s4
  %s6 = sld [smem:[#allocation0]]
  $region42: #{rnn_agent_forward.1} parent=0
    _
  %s8 = ssub.s32 1, %s6
  %s9 = scalar_select 0, %s8, %s6
  $region1: #{rnn_agent_forward.1} parent=0
    #allocation2 [shape = 'u8[4096]{0}', space=vmem, size = 0x1000, scoped, tag = 'input window, operand 0, single buffered']
    #allocation3 [shape = 's32[1]{0}', space=sflag, size = 0x4, scoped, tag = 'scoped memory for rnn_agent_forward.1']
    #allocation4 [shape = 's32[1]{0}', space=sflag, size = 0x4, scoped, tag = 'scoped memory for rnn_agent_forward.1']
    #allocation5 [shape = 'u8[4096]{0}', space=vmem, size = 0x1000, scoped, tag = 'input window, operand 1, single buffered']
    #allocation6 [shape = 's32[1]{0}', space=sflag, size = 0x4, scoped, tag = 'scoped memory for rnn_agent_forward.1']
    #allocation7 [shape = 'u8[102400]{0}', space=vmem, size = 0x19000, scoped, tag = 'input window, operand 2, single buffered']
    #allocation8 [shape = 'u8[4096]{0}', space=vmem, size = 0x1000, scoped, tag = 'output window, operand 0, single buffered']
    #allocation9 [shape = 'u8[4096]{0}', space=vmem, size = 0x1000, scoped, tag = 'output window, operand 1, single buffered']
    #allocation10 [shape = 's32[1]{0}', space=sflag, size = 0x4, scoped, tag = 'scoped memory for rnn_agent_forward.1']
    %10 = vsyncpa [#allocation3], 0
    %11 = vsyncpa [#allocation6], 0
    %12 = vsyncpa [#allocation4], 0
    %13 = vsyncpa [#allocation10], 0
    // Predicated region
    $region2: #{rnn_agent_forward.1} parent=1 // pred_check
      _
    $region3: #{rnn_agent_forward.1} parent=1 // pred_check_branch
      %15 = sbr.rel (0) target = $region5
    $region4: #{rnn_agent_forward.1} parent=1 // pred_region
      %s17 = ssub.s32 128, 128
      %18 = vsyncadd [#allocation3], %s17
      %s20 = sshll.u32 [#allocation2], 4
      %s21 = int_to_ptr.vmem [resolvable:$true] %s20
      %23 = dma.hbm_to_vmem [thread:$0]  %s0, 128, %s21, [#allocation3]
    $region5: #{rnn_agent_forward.1} parent=1 // pred_fallthru
      _
    // Predicated region
    $region6: #{rnn_agent_forward.1} parent=1 // pred_check
      _
    $region7: #{rnn_agent_forward.1} parent=1 // pred_check_branch
      %25 = sbr.rel (0) target = $region9
    $region8: #{rnn_agent_forward.1} parent=1 // pred_region
      %s27 = ssub.s32 128, 128
      %28 = vsyncadd [#allocation6], %s27
      %s30 = sshll.u32 [#allocation5], 4
      %s31 = int_to_ptr.vmem [resolvable:$true] %s30
      %33 = dma.hbm_to_vmem [thread:$0]  %s1, 128, %s31, [#allocation6]
    $region9: #{rnn_agent_forward.1} parent=1 // pred_fallthru
      _
    // Predicated region
    $region10: #{rnn_agent_forward.1} parent=1 // pred_check
      _
    $region11: #{rnn_agent_forward.1} parent=1 // pred_check_branch
      %35 = sbr.rel (0) target = $region13
    $region12: #{rnn_agent_forward.1} parent=1 // pred_region
      %s37 = ssub.s32 3200, 3200
      %38 = vsyncadd [#allocation6], %s37
      %s39 = sshll.u32 [#allocation7], 4
      %s40 = int_to_ptr.vmem [resolvable:$true] %s39
      %45 = dma.hbm_to_vmem [thread:$0]  %s2, 3200, %s40, [#allocation6], 128, 128, 8
    $region13: #{rnn_agent_forward.1} parent=1 // pred_fallthru
      _
    // Predicated region
    $region14: #{rnn_agent_forward.1} parent=1 // pred_check
      _
    $region15: #{rnn_agent_forward.1} parent=1 // pred_check_branch
      %47 = sbr.rel (0) target = $region17
    $region16: #{rnn_agent_forward.1} parent=1 // pred_region
      %48 = dma.done [#allocation3], 128
    $region17: #{rnn_agent_forward.1} parent=1 // pred_fallthru
      _
    // Predicated region
    $region18: #{rnn_agent_forward.1} parent=1 // pred_check
      _
    $region19: #{rnn_agent_forward.1} parent=1 // pred_check_branch
      %50 = sbr.rel (0) target = $region21
    $region20: #{rnn_agent_forward.1} parent=1 // pred_region
      %51 = dma.done [#allocation6], 128
    $region21: #{rnn_agent_forward.1} parent=1 // pred_fallthru
      _
    // Predicated region
    $region22: #{rnn_agent_forward.1} parent=1 // pred_check
      _
    $region23: #{rnn_agent_forward.1} parent=1 // pred_check_branch
      %53 = sbr.rel (0) target = $region25
    $region24: #{rnn_agent_forward.1} parent=1 // pred_region
      %54 = dma.done [#allocation6], 3200
    $region25: #{rnn_agent_forward.1} parent=1 // pred_fallthru
      _
    %v55 = vld [vmem:[#allocation7] sm:$0xff]
    %v56 = vld [vmem:[#allocation7 + $0x8] sm:$0xff]
    %v57 = vld [vmem:[#allocation7 + $0x10] sm:$0xff]
    %v58 = vld [vmem:[#allocation7 + $0x18] sm:$0xff]
    %v59 = vld [vmem:[#allocation7 + $0x20] sm:$0xff]
    %v60 = vld [vmem:[#allocation7 + $0x28] sm:$0xff]
    %v61 = vld [vmem:[#allocation7 + $0x30] sm:$0xff]
    %v62 = vld [vmem:[#allocation7 + $0x38] sm:$0xff]
    %v63 = vld [vmem:[#allocation7 + $0x40] sm:$0xff]
    %v64 = vld [vmem:[#allocation7 + $0x48] sm:$0xff]
    %v65 = vld [vmem:[#allocation7 + $0x50] sm:$0xff]
    %v66 = vld [vmem:[#allocation7 + $0x58] sm:$0xff]
    %v67 = vld [vmem:[#allocation7 + $0x60] sm:$0xff]
    %v68 = vld [vmem:[#allocation7 + $0x68] sm:$0xff]
    %v69 = vld [vmem:[#allocation7 + $0x70] sm:$0xff]
    %v70 = vld [vmem:[#allocation7 + $0x78] sm:$0xff]
    %v71 = vld [vmem:[#allocation7 + $0xa0] sm:$0xff]
    %v72 = vld [vmem:[#allocation7 + $0xa8] sm:$0xff]
    %v73 = vld [vmem:[#allocation7 + $0xb0] sm:$0xff]
    %v74 = vld [vmem:[#allocation7 + $0xb8] sm:$0xff]
    %v75 = vld [vmem:[#allocation7 + $0xc0] sm:$0x1]
    %v76 = vld [vmem:[#allocation7 + $0xc1] sm:$0x1]
    %v77 = vld [vmem:[#allocation7 + $0xc2] sm:$0x1]
    %v78 = vld [vmem:[#allocation7 + $0xc3] sm:$0x1]
    %v79 = vld [vmem:[#allocation2] sm:$0xff]
    %v80 = vld [vmem:[#allocation5] sm:$0xff]
    %v81 = vlaneseq
    %v82 = vshrl.u32 %v81, 7
    %v83 = vsub.s32 0, %v82
    %v84 = vrot.slane %v75, %v83
    %vm85 = vcmask 195584
    %v87 = vsel %vm85, %v79, 0
    %89 = vmatprep.subr.mxu0 0.0
    %90 = vmatpush1.msra.mxu0 %v55
    %91 = vmatprep.subr.mxu0 0.0
    %92 = vmatpush1.msra.mxu0 %v56
    %93 = vmatprep.subr.mxu0 0.0
    %94 = vmatpush1.msra.mxu0 %v57
    %95 = vmatprep.subr.mxu0 0.0
    %96 = vmatpush1.msra.mxu0 0.0
    %97 = vmatprep.subr.mxu0 0.0
    %98 = vmatpush1.msra.mxu0 0.0
    %99 = vmatprep.subr.mxu0 0.0
    %100 = vmatpush1.msra.mxu0 0.0
    %101 = vmatprep.subr.mxu0 0.0
    %102 = vmatpush1.msra.mxu0 0.0
    %103 = vmatprep.subr.mxu0 0.0
    %104 = vmatpush1.msra.mxu0 0.0
    %105 = vmatprep.subr.mxu0 0.0
    %106 = vmatpush1.msra.mxu0 0.0
    %107 = vmatprep.subr.mxu0 0.0
    %108 = vmatpush1.msra.mxu0 0.0
    %109 = vmatprep.subr.mxu0 0.0
    %110 = vmatpush1.msra.mxu0 0.0
    %111 = vmatprep.subr.mxu0 0.0
    %112 = vmatpush1.msra.mxu0 0.0
    %113 = vmatprep.subr.mxu0 0.0
    %114 = vmatpush1.msra.mxu0 0.0
    %115 = vmatprep.subr.mxu0 0.0
    %116 = vmatpush1.msra.mxu0 0.0
    %117 = vmatprep.subr.mxu0 0.0
    %118 = vmatpush1.msra.mxu0 0.0
    %119 = vmatprep.subr.mxu0 0.0
    %120 = vmatpush1.msra.mxu0 0.0
    %121 = vmatprep.subr.mxu0 0.0
    %122 = vmatpush1.msra.mxu0 0.0
    %123 = vmatprep.subr.mxu0 0.0
    %124 = vmatpush1.msra.mxu0 0.0
    %125 = vmatprep.subr.mxu0 0.0
    %126 = vmatpush1.msra.mxu0 0.0
    %127 = vmatprep.subr.mxu0 0.0
    %128 = vmatpush1.msra.mxu0 0.0
    %129 = vmatprep.subr.mxu0 0.0
    %130 = vmatpush1.msra.mxu0 0.0
    %131 = vmatprep.subr.mxu0 0.0
    %132 = vmatpush1.msra.mxu0 0.0
    %133 = vmatprep.subr.mxu0 0.0
    %134 = vmatpush1.msra.mxu0 0.0
    %135 = vmatprep.subr.mxu0 0.0
    %136 = vmatpush1.msra.mxu0 0.0
    %137 = vmatprep.subr.mxu0 0.0
    %138 = vmatpush1.msra.mxu0 0.0
    %139 = vmatprep.subr.mxu0 0.0
    %140 = vmatpush1.msra.mxu0 0.0
    %141 = vmatprep.subr.mxu0 0.0
    %142 = vmatpush1.msra.mxu0 0.0
    %143 = vmatprep.subr.mxu0 0.0
    %144 = vmatpush1.msra.mxu0 0.0
    %145 = vmatprep.subr.mxu0 0.0
    %146 = vmatpush1.msra.mxu0 0.0
    %147 = vmatprep.subr.mxu0 0.0
    %148 = vmatpush1.msra.mxu0 0.0
    %149 = vmatprep.subr.mxu0 0.0
    %150 = vmatpush1.msra.mxu0 0.0
    %151 = vmatprep.subr.mxu0 0.0
    %152 = vmatpush1.msra.mxu0 0.0
    %153 = vmatprep.mubr.f32.mxu0 0.0
    %154 = vmatmul.mubr.f32.gmra.mrb[0].mxu0 %v87
    %v155 = vpop.f32.mrb[0].mxu0
    %v156 = vadd.f32 %v84, %v155
    %v157 = vpop.f32.mrb[0].mxu0
    %158 = vdwg.mxu0
    %v159 = vmax.f32 %v156, 0.0
    %v160 = vlaneseq
    %v161 = vshrl.u32 %v160, 7
    %v162 = vsub.s32 0, %v161
    %v163 = vrot.slane %v76, %v162
    %vm164 = vcmask 326656
    %v166 = vsel %vm164, %v159, 0
    %168 = vmatprep.subr.mxu0 0.0
    %169 = vmatpush1.msra.mxu0 %v58
    %170 = vmatprep.subr.mxu0 0.0
    %171 = vmatpush1.msra.mxu0 %v59
    %172 = vmatprep.subr.mxu0 0.0
    %173 = vmatpush1.msra.mxu0 %v60
    %174 = vmatprep.subr.mxu0 0.0
    %175 = vmatpush1.msra.mxu0 %v61
    %176 = vmatprep.subr.mxu0 0.0
    %177 = vmatpush1.msra.mxu0 %v62
    %178 = vmatprep.subr.mxu0 0.0
    %179 = vmatpush1.msra.mxu0 0.0
    %180 = vmatprep.subr.mxu0 0.0
    %181 = vmatpush1.msra.mxu0 0.0
    %182 = vmatprep.subr.mxu0 0.0
    %183 = vmatpush1.msra.mxu0 0.0
    %184 = vmatprep.subr.mxu0 0.0
    %185 = vmatpush1.msra.mxu0 0.0
    %186 = vmatprep.subr.mxu0 0.0
    %187 = vmatpush1.msra.mxu0 0.0
    %188 = vmatprep.subr.mxu0 0.0
    %189 = vmatpush1.msra.mxu0 0.0
    %190 = vmatprep.subr.mxu0 0.0
    %191 = vmatpush1.msra.mxu0 0.0
    %192 = vmatprep.subr.mxu0 0.0
    %193 = vmatpush1.msra.mxu0 0.0
    %194 = vmatprep.subr.mxu0 0.0
    %195 = vmatpush1.msra.mxu0 0.0
    %196 = vmatprep.subr.mxu0 0.0
    %197 = vmatpush1.msra.mxu0 0.0
    %198 = vmatprep.subr.mxu0 0.0
    %199 = vmatpush1.msra.mxu0 0.0
    %200 = vmatprep.subr.mxu0 0.0
    %201 = vmatpush1.msra.mxu0 0.0
    %202 = vmatprep.subr.mxu0 0.0
    %203 = vmatpush1.msra.mxu0 0.0
    %204 = vmatprep.subr.mxu0 0.0
    %205 = vmatpush1.msra.mxu0 0.0
    %206 = vmatprep.subr.mxu0 0.0
    %207 = vmatpush1.msra.mxu0 0.0
    %208 = vmatprep.subr.mxu0 0.0
    %209 = vmatpush1.msra.mxu0 0.0
    %210 = vmatprep.subr.mxu0 0.0
    %211 = vmatpush1.msra.mxu0 0.0
    %212 = vmatprep.subr.mxu0 0.0
    %213 = vmatpush1.msra.mxu0 0.0
    %214 = vmatprep.subr.mxu0 0.0
    %215 = vmatpush1.msra.mxu0 0.0
    %216 = vmatprep.subr.mxu0 0.0
    %217 = vmatpush1.msra.mxu0 0.0
    %218 = vmatprep.subr.mxu0 0.0
    %219 = vmatpush1.msra.mxu0 0.0
    %220 = vmatprep.subr.mxu0 0.0
    %221 = vmatpush1.msra.mxu0 0.0
    %222 = vmatprep.subr.mxu0 0.0
    %223 = vmatpush1.msra.mxu0 0.0
    %224 = vmatprep.subr.mxu0 0.0
    %225 = vmatpush1.msra.mxu0 0.0
    %226 = vmatprep.subr.mxu0 0.0
    %227 = vmatpush1.msra.mxu0 0.0
    %228 = vmatprep.subr.mxu0 0.0
    %229 = vmatpush1.msra.mxu0 0.0
    %230 = vmatprep.subr.mxu0 0.0
    %231 = vmatpush1.msra.mxu0 0.0
    %232 = vmatprep.mubr.f32.mxu0 0.0
    %233 = vmatmul.mubr.f32.gmra.mrb[0].mxu0 %v166
    %v234 = vpop.f32.mrb[0].mxu0
    %v235 = vadd.f32 %v163, %v234
    %v236 = vpop.f32.mrb[0].mxu0
    %237 = vdwg.mxu0
    %v238 = vmax.f32 %v235, 0.0
    %240 = vrot.lane.b32.xlu0 %v80, 32
    %v241 = vpop.permute.xlu0 %240
    %vm243 = vcmask 261120
    %v244 = vsel %vm243, %v238, %v241
    %v245 = vlaneseq
    %v246 = vshrl.u32 %v245, 7
    %v247 = vsub.s32 0, %v246
    %v248 = vrot.slane %v77, %v247
    %vm249 = vcmask 523264
    %v251 = vsel %vm249, %v244, 0
    %253 = vmatprep.subr.mxu0 0.0
    %254 = vmatpush1.msra.mxu0 %v63
    %255 = vmatprep.subr.mxu0 0.0
    %256 = vmatpush1.msra.mxu0 %v64
    %257 = vmatprep.subr.mxu0 0.0
    %258 = vmatpush1.msra.mxu0 %v65
    %259 = vmatprep.subr.mxu0 0.0
    %260 = vmatpush1.msra.mxu0 %v66
    %261 = vmatprep.subr.mxu0 0.0
    %262 = vmatpush1.msra.mxu0 %v67
    %263 = vmatprep.subr.mxu0 0.0
    %264 = vmatpush1.msra.mxu0 %v68
    %265 = vmatprep.subr.mxu0 0.0
    %266 = vmatpush1.msra.mxu0 %v69
    %267 = vmatprep.subr.mxu0 0.0
    %268 = vmatpush1.msra.mxu0 %v70
    %269 = vmatprep.subr.mxu0 0.0
    %270 = vmatpush1.msra.mxu0 0.0
    %271 = vmatprep.subr.mxu0 0.0
    %272 = vmatpush1.msra.mxu0 0.0
    %273 = vmatprep.subr.mxu0 0.0
    %274 = vmatpush1.msra.mxu0 0.0
    %275 = vmatprep.subr.mxu0 0.0
    %276 = vmatpush1.msra.mxu0 0.0
    %277 = vmatprep.subr.mxu0 0.0
    %278 = vmatpush1.msra.mxu0 0.0
    %279 = vmatprep.subr.mxu0 0.0
    %280 = vmatpush1.msra.mxu0 0.0
    %281 = vmatprep.subr.mxu0 0.0
    %282 = vmatpush1.msra.mxu0 0.0
    %283 = vmatprep.subr.mxu0 0.0
    %284 = vmatpush1.msra.mxu0 0.0
    %285 = vmatprep.subr.mxu0 0.0
    %286 = vmatpush1.msra.mxu0 0.0
    %287 = vmatprep.subr.mxu0 0.0
    %288 = vmatpush1.msra.mxu0 0.0
    %289 = vmatprep.subr.mxu0 0.0
    %290 = vmatpush1.msra.mxu0 0.0
    %291 = vmatprep.subr.mxu0 0.0
    %292 = vmatpush1.msra.mxu0 0.0
    %293 = vmatprep.subr.mxu0 0.0
    %294 = vmatpush1.msra.mxu0 0.0
    %295 = vmatprep.subr.mxu0 0.0
    %296 = vmatpush1.msra.mxu0 0.0
    %297 = vmatprep.subr.mxu0 0.0
    %298 = vmatpush1.msra.mxu0 0.0
    %299 = vmatprep.subr.mxu0 0.0
    %300 = vmatpush1.msra.mxu0 0.0
    %301 = vmatprep.subr.mxu0 0.0
    %302 = vmatpush1.msra.mxu0 0.0
    %303 = vmatprep.subr.mxu0 0.0
    %304 = vmatpush1.msra.mxu0 0.0
    %305 = vmatprep.subr.mxu0 0.0
    %306 = vmatpush1.msra.mxu0 0.0
    %307 = vmatprep.subr.mxu0 0.0
    %308 = vmatpush1.msra.mxu0 0.0
    %309 = vmatprep.subr.mxu0 0.0
    %310 = vmatpush1.msra.mxu0 0.0
    %311 = vmatprep.subr.mxu0 0.0
    %312 = vmatpush1.msra.mxu0 0.0
    %313 = vmatprep.subr.mxu0 0.0
    %314 = vmatpush1.msra.mxu0 0.0
    %315 = vmatprep.subr.mxu0 0.0
    %316 = vmatpush1.msra.mxu0 0.0
    %317 = vmatprep.mubr.f32.mxu0 0.0
    %318 = vmatmul.mubr.f32.gmra.mrb[0].mxu0 %v251
    %v319 = vpop.f32.mrb[0].mxu0
    %v320 = vadd.f32 %v248, %v319
    %v321 = vpop.f32.mrb[0].mxu0
    %322 = vdwg.mxu0
    %v323 = vxor.u32 %v320, 2147483648
    %v324 = vmul.f32 %v323, 1.442695
    %v325 = vpow.pop %v324
    %v326 = vadd.f32 %v325, 1.0
    %v327 = vrcp.pop %v326
    %v328 = vmul.f32 1.0, %v327
    %330 = vrot.lane.b32.xlu0 %v320, 32
    %v331 = vpop.permute.xlu0 %330
    %v333 = vmul.f32 %v328, %v331
    %335 = vrot.lane.b32.xlu0 %v333, 64
    %v336 = vpop.permute.xlu0 %335
    %v338 = vadd.f32 %v320, %v336
    %v339 = vtanh.pop %v338
    %v340 = vsub.f32 1.0, %v328
    %342 = vrot.lane.b32.xlu0 %v339, 96
    %v343 = vpop.permute.xlu0 %342
    %v345 = vmul.f32 %v340, %v343
    %v346 = vmul.f32 %v328, %v241
    %v347 = vadd.f32 %v345, %v346
    %v348 = vlaneseq
    %v349 = vshrl.u32 %v348, 7
    %v350 = vsub.s32 0, %v349
    %v351 = vrot.slane %v78, %v350
    %353 = vrot.lane.b32.xlu0 %v347, 96
    %v354 = vpop.permute.xlu0 %353
    %v355 = vsel %vm243, %v354, 0
    %357 = vmatprep.subr.mxu0 0.0
    %358 = vmatpush1.msra.mxu0 %v71
    %359 = vmatprep.subr.mxu0 0.0
    %360 = vmatpush1.msra.mxu0 %v72
    %361 = vmatprep.subr.mxu0 0.0
    %362 = vmatpush1.msra.mxu0 %v73
    %363 = vmatprep.subr.mxu0 0.0
    %364 = vmatpush1.msra.mxu0 %v74
    %365 = vmatprep.subr.mxu0 0.0
    %366 = vmatpush1.msra.mxu0 0.0
    %367 = vmatprep.subr.mxu0 0.0
    %368 = vmatpush1.msra.mxu0 0.0
    %369 = vmatprep.subr.mxu0 0.0
    %370 = vmatpush1.msra.mxu0 0.0
    %371 = vmatprep.subr.mxu0 0.0
    %372 = vmatpush1.msra.mxu0 0.0
    %373 = vmatprep.subr.mxu0 0.0
    %374 = vmatpush1.msra.mxu0 0.0
    %375 = vmatprep.subr.mxu0 0.0
    %376 = vmatpush1.msra.mxu0 0.0
    %377 = vmatprep.subr.mxu0 0.0
    %378 = vmatpush1.msra.mxu0 0.0
    %379 = vmatprep.subr.mxu0 0.0
    %380 = vmatpush1.msra.mxu0 0.0
    %381 = vmatprep.subr.mxu0 0.0
    %382 = vmatpush1.msra.mxu0 0.0
    %383 = vmatprep.subr.mxu0 0.0
    %384 = vmatpush1.msra.mxu0 0.0
    %385 = vmatprep.subr.mxu0 0.0
    %386 = vmatpush1.msra.mxu0 0.0
    %387 = vmatprep.subr.mxu0 0.0
    %388 = vmatpush1.msra.mxu0 0.0
    %389 = vmatprep.subr.mxu0 0.0
    %390 = vmatpush1.msra.mxu0 0.0
    %391 = vmatprep.subr.mxu0 0.0
    %392 = vmatpush1.msra.mxu0 0.0
    %393 = vmatprep.subr.mxu0 0.0
    %394 = vmatpush1.msra.mxu0 0.0
    %395 = vmatprep.subr.mxu0 0.0
    %396 = vmatpush1.msra.mxu0 0.0
    %397 = vmatprep.subr.mxu0 0.0
    %398 = vmatpush1.msra.mxu0 0.0
    %399 = vmatprep.subr.mxu0 0.0
    %400 = vmatpush1.msra.mxu0 0.0
    %401 = vmatprep.subr.mxu0 0.0
    %402 = vmatpush1.msra.mxu0 0.0
    %403 = vmatprep.subr.mxu0 0.0
    %404 = vmatpush1.msra.mxu0 0.0
    %405 = vmatprep.subr.mxu0 0.0
    %406 = vmatpush1.msra.mxu0 0.0
    %407 = vmatprep.subr.mxu0 0.0
    %408 = vmatpush1.msra.mxu0 0.0
    %409 = vmatprep.subr.mxu0 0.0
    %410 = vmatpush1.msra.mxu0 0.0
    %411 = vmatprep.subr.mxu0 0.0
    %412 = vmatpush1.msra.mxu0 0.0
    %413 = vmatprep.subr.mxu0 0.0
    %414 = vmatpush1.msra.mxu0 0.0
    %415 = vmatprep.subr.mxu0 0.0
    %416 = vmatpush1.msra.mxu0 0.0
    %417 = vmatprep.subr.mxu0 0.0
    %418 = vmatpush1.msra.mxu0 0.0
    %419 = vmatprep.subr.mxu0 0.0
    %420 = vmatpush1.msra.mxu0 0.0
    %421 = vmatprep.mubr.f32.mxu0 0.0
    %422 = vmatmul.mubr.f32.gmra.mrb[0].mxu0 %v355
    %v423 = vpop.f32.mrb[0].mxu0
    %v424 = vadd.f32 %v351, %v423
    %v425 = vpop.f32.mrb[0].mxu0
    %426 = vdwg.mxu0
    %vm427 = vcmask 48128
    %428 = vst.msk [vmem:[#allocation8] sm:$0xff] %vm427, %v424
    %430 = vst.msk [vmem:[#allocation9] sm:$0xff] %vm243, %v354
    // Predicated region
    $region26: #{rnn_agent_forward.1} parent=1 // pred_check
      _
    $region27: #{rnn_agent_forward.1} parent=1 // pred_check_branch
      %432 = sbr.rel (0) target = $region29
    $region28: #{rnn_agent_forward.1} parent=1 // pred_region
      %s434 = ssub.s32 128, 128
      %435 = vsyncadd [#allocation4], %s434
      %s437 = sshll.u32 [#allocation8], 4
      %s438 = int_to_ptr.vmem [resolvable:$true] %s437
      %440 = dma.vmem_to_hbm [thread:$0]  %s438, 128, %s3, [#allocation4]
    $region29: #{rnn_agent_forward.1} parent=1 // pred_fallthru
      _
    // Predicated region
    $region30: #{rnn_agent_forward.1} parent=1 // pred_check
      _
    $region31: #{rnn_agent_forward.1} parent=1 // pred_check_branch
      %442 = sbr.rel (0) target = $region33
    $region32: #{rnn_agent_forward.1} parent=1 // pred_region
      %s444 = ssub.s32 128, 128
      %445 = vsyncadd [#allocation10], %s444
      %s447 = sshll.u32 [#allocation9], 4
      %s448 = int_to_ptr.vmem [resolvable:$true] %s447
      %450 = dma.vmem_to_hbm [thread:$0]  %s448, 128, %s4, [#allocation10]
    $region33: #{rnn_agent_forward.1} parent=1 // pred_fallthru
      _
    // Predicated region
    $region34: #{rnn_agent_forward.1} parent=1 // pred_check
      _
    $region35: #{rnn_agent_forward.1} parent=1 // pred_check_branch
      %452 = sbr.rel (0) target = $region37
    $region36: #{rnn_agent_forward.1} parent=1 // pred_region
      %453 = dma.done [#allocation4], 128
    $region37: #{rnn_agent_forward.1} parent=1 // pred_fallthru
      _
    // Predicated region
    $region38: #{rnn_agent_forward.1} parent=1 // pred_check
      _
    $region39: #{rnn_agent_forward.1} parent=1 // pred_check_branch
      %455 = sbr.rel (0) target = $region41
    $region40: #{rnn_agent_forward.1} parent=1 // pred_region
      %456 = dma.done [#allocation10], 128
    $region41: #{rnn_agent_forward.1} parent=1 // pred_fallthru
      _
    %457 = vsyncpa [#allocation3], 1
    %458 = vsyncpa [#allocation6], 1
    %459 = vsyncpa [#allocation4], 1
    %460 = vsyncpa [#allocation10], 1

</llo_original>
